<compile_context>
chip_gen: v5e
topology: v5e:2x2
jax: 0.10.0
libtpu: 0.0.40
codegen_flags: <defaults>
</compile_context>

<pallas_src>
import functools
import math

import jax
import jax.numpy as jnp
from jax.experimental import pallas as pl
from jax.experimental.pallas import tpu as pltpu

NEG_INF = -1e30  # large-negative mask value (avoids inf-inf -> NaN in online softmax)


def _round_up(x, m):
    return (x + m - 1) // m * m


def _flash_attn_kernel(q_ref, k_ref, v_ref,
                       wq_ref, bq_ref, wk_ref, bk_ref, wv_ref, bv_ref,
                       o_ref,
                       qp_ref, m_ref, l_ref, acc_ref,
                       *, scale, seq_len, causal, mask_keys):
    qi = pl.program_id(1)
    ki = pl.program_id(2)
    n_kv = pl.num_programs(2)

    tq = q_ref.shape[1]
    tkv = k_ref.shape[1]

    # ---- per (batch, q-tile) init: project+scale Q once, reset softmax state. ----
    @pl.when(ki == 0)
    def _():
        qp = jnp.dot(q_ref[0], wq_ref[...], preferred_element_type=jnp.float32)
        qp = (qp + bq_ref[...].astype(jnp.float32)) * scale
        qp_ref[...] = qp.astype(qp_ref.dtype)                     # native dtype for MXU
        m_ref[...] = jnp.full(m_ref.shape, NEG_INF, m_ref.dtype)
        l_ref[...] = jnp.zeros(l_ref.shape, l_ref.dtype)
        acc_ref[...] = jnp.zeros(acc_ref.shape, acc_ref.dtype)

    # ---- project current K / V tile (native-dtype operands, f32 accumulate). ----
    kp = jnp.dot(k_ref[0], wk_ref[...], preferred_element_type=jnp.float32)
    kp = kp + bk_ref[...].astype(jnp.float32)
    vp = jnp.dot(v_ref[0], wv_ref[...], preferred_element_type=jnp.float32)
    vp = vp + bv_ref[...].astype(jnp.float32)

    # ---- scores (tq, tkv): contract last dims directly, no materialized k^T. ----
    s = jax.lax.dot_general(
        qp_ref[...], kp.astype(qp_ref.dtype),
        dimension_numbers=(((1,), (1,)), ((), ())),
        preferred_element_type=jnp.float32)

    if mask_keys or causal:
        col = ki * tkv + jax.lax.broadcasted_iota(jnp.int32, (tq, tkv), 1)
        valid = col < seq_len
        if causal:
            row = qi * tq + jax.lax.broadcasted_iota(jnp.int32, (tq, tkv), 0)
            valid = jnp.logical_and(valid, col <= row)
        s = jnp.where(valid, s, NEG_INF)

    # ---- online softmax update (all f32 on the VPU/EUP). ----
    m_prev = m_ref[...]
    m_new = jnp.maximum(m_prev, jnp.max(s, axis=-1, keepdims=True))
    alpha = jnp.exp(m_prev - m_new)
    p = jnp.exp(s - m_new)
    l_ref[...] = alpha * l_ref[...] + jnp.sum(p, axis=-1, keepdims=True)
    acc_ref[...] = alpha * acc_ref[...] + jnp.dot(
        p.astype(v_ref.dtype), vp.astype(v_ref.dtype),
        preferred_element_type=jnp.float32)
    m_ref[...] = m_new

    # ---- finalize: EUP reciprocal + one Newton step, then lane-dense store. ----
    @pl.when(ki == n_kv - 1)
    def _():
        l = l_ref[...]
        inv = pl.reciprocal(l, approx=True)
        inv = inv * (2.0 - l * inv)          # cheap refinement on a (tq, 1) vector
        o_ref[0] = (acc_ref[...] * inv).astype(o_ref.dtype)


def single_head_attention(q, k, v, params, *, causal=False, seq_block=128):
    """q, k, v: (B, T, D). params: wq/bq/wk/bk/wv/bv with PyTorch (out, in) weights."""
    B, T, D = q.shape
    dtype = q.dtype

    # Sublane granularity depends on dtype packing (f32: 8, bf16: 16, int8/fp8: 32).
    itemsize = jnp.dtype(dtype).itemsize
    sub = {4: 8, 2: 16, 1: 32}.get(itemsize, 8)

    Dp = _round_up(D, 128)                              # lane-dense head dim
    ts = _round_up(min(seq_block, _round_up(T, sub)), sub)
    Tp = _round_up(T, ts)

    def pad_act(x):
        return jnp.pad(x, ((0, 0), (0, Tp - T), (0, Dp - D)))

    def pad_w(w):  # (out, in) torch layout -> (in, out), zero-padded to (Dp, Dp)
        return jnp.pad(w.T, ((0, Dp - D), (0, Dp - D))).astype(dtype)

    def pad_b(b):
        return jnp.pad(b.reshape(1, D), ((0, 0), (0, Dp - D))).astype(dtype)

    q_p, k_p, v_p = pad_act(q), pad_act(k), pad_act(v)
    wq_p, wk_p, wv_p = pad_w(params["wq"]), pad_w(params["wk"]), pad_w(params["wv"])
    bq_p, bk_p, bv_p = pad_b(params["bq"]), pad_b(params["bk"]), pad_b(params["bv"])

    act_q_spec = pl.BlockSpec((1, ts, Dp), lambda b, qi, ki: (b, qi, 0))
    act_kv_spec = pl.BlockSpec((1, ts, Dp), lambda b, qi, ki: (b, ki, 0))
    # Weight / bias blocks are grid-invariant (constant index_map): Pallas will not
    # re-DMA them between grid steps.
    w_spec = pl.BlockSpec((Dp, Dp), lambda b, qi, ki: (0, 0))
    b_spec = pl.BlockSpec((1, Dp), lambda b, qi, ki: (0, 0))
    out_spec = pl.BlockSpec((1, ts, Dp), lambda b, qi, ki: (b, qi, 0))

    kernel = functools.partial(
        _flash_attn_kernel,
        scale=1.0 / math.sqrt(D),   # d_tensor == d_model in the PyTorch module
        seq_len=T,
        causal=causal,
        mask_keys=(Tp != T))

    out = pl.pallas_call(
        kernel,
        out_shape=jax.ShapeDtypeStruct((B, Tp, Dp), dtype),
        grid_spec=pltpu.PrefetchScalarGridSpec(
            num_scalar_prefetch=0,
            grid=(B, Tp // ts, Tp // ts),
            in_specs=[act_q_spec, act_kv_spec, act_kv_spec,
                      w_spec, b_spec, w_spec, b_spec, w_spec, b_spec],
            out_specs=out_spec,
            scratch_shapes=[
                pltpu.VMEM((ts, Dp), dtype),        # projected + scaled Q tile
                pltpu.VMEM((ts, 1), jnp.float32),   # running max
                pltpu.VMEM((ts, 1), jnp.float32),   # running denominator
                pltpu.VMEM((ts, Dp), jnp.float32),  # output accumulator
            ]),
        compiler_params=pltpu.CompilerParams(
            dimension_semantics=("parallel", "parallel", "arbitrary"),
            vmem_limit_bytes=48 * 1024 * 1024),
    )(q_p, k_p, v_p, wq_p, bq_p, wk_p, bk_p, wv_p, bv_p)

    return out[:, :T, :D]


def _reference(q, k, v, params, causal=False):
    """Pure-JAX reference mirroring the PyTorch forward."""
    qp = q @ params["wq"].T + params["bq"]
    kp = k @ params["wk"].T + params["bk"]
    vp = v @ params["wv"].T + params["bv"]
    d = kp.shape[-1]
    score = qp @ jnp.swapaxes(kp, 1, 2) / math.sqrt(d)
    if causal:
        T = q.shape[1]
        tri = jnp.triu(jnp.ones((T, T), bool), k=1)
        score = jnp.where(tri, -jnp.inf, score)
    attn = jax.nn.softmax(score, axis=-1)
    return attn @ vp


if __name__ == "__main__":
    B, T, D = 2, 8, 32
    key = jax.random.PRNGKey(0)
    ks = jax.random.split(key, 9)

    bound = 1.0 / math.sqrt(D)
    params = {
        "wq": jax.random.uniform(ks[0], (D, D), jnp.float32, -bound, bound),
        "bq": jax.random.uniform(ks[1], (D,), jnp.float32, -bound, bound),
        "wk": jax.random.uniform(ks[2], (D, D), jnp.float32, -bound, bound),
        "bk": jax.random.uniform(ks[3], (D,), jnp.float32, -bound, bound),
        "wv": jax.random.uniform(ks[4], (D, D), jnp.float32, -bound, bound),
        "bv": jax.random.uniform(ks[5], (D,), jnp.float32, -bound, bound),
    }

    q = jax.random.normal(ks[6], (B, T, D), jnp.float32)
    k = jax.random.normal(ks[7], (B, T, D), jnp.float32)
    v = jax.random.normal(ks[8], (B, T, D), jnp.float32)

    # Default path (mask=None).
    out = jax.block_until_ready(single_head_attention(q, k, v, params))
    ref = _reference(q, k, v, params)
    assert out.shape == (B, T, D)
    assert jnp.allclose(out, ref, atol=1e-3, rtol=1e-3), "mismatch vs reference"

    # Causal-mask path (PyTorch self.mask branch).
    out_c = jax.block_until_ready(single_head_attention(q, k, v, params, causal=True))
    ref_c = _reference(q, k, v, params, causal=True)
    assert jnp.allclose(out_c, ref_c, atol=1e-3, rtol=1e-3), "mismatch vs causal ref"

    # Multi-tile flash path: T=20 with 8-wide seq tiles (exercises online softmax
    # across kv tiles + padded-key masking).
    T2 = 20
    q2 = jax.random.normal(jax.random.PRNGKey(1), (B, T2, D), jnp.float32)
    k2 = jax.random.normal(jax.random.PRNGKey(2), (B, T2, D), jnp.float32)
    v2 = jax.random.normal(jax.random.PRNGKey(3), (B, T2, D), jnp.float32)
    out2 = jax.block_until_ready(
        single_head_attention(q2, k2, v2, params, seq_block=8))
    ref2 = _reference(q2, k2, v2, params)
    assert out2.shape == (B, T2, D)
    assert jnp.allclose(out2, ref2, atol=1e-3, rtol=1e-3), "mismatch (tiled) vs reference"

    print("KERNEL_OK")
</pallas_src>

<mosaic_0001>
module attributes {stable_mosaic.version = 11 : i64} {
  func.func @_flash_attn_kernel(%arg0: i32, %arg1: i32, %arg2: i32, %arg3: memref<1x8x128xf32, #tpu.memory_space<vmem>>, %arg4: memref<1x8x128xf32, #tpu.memory_space<vmem>>, %arg5: memref<1x8x128xf32, #tpu.memory_space<vmem>>, %arg6: memref<128x128xf32, #tpu.memory_space<vmem>>, %arg7: memref<1x128xf32, #tpu.memory_space<vmem>>, %arg8: memref<128x128xf32, #tpu.memory_space<vmem>>, %arg9: memref<1x128xf32, #tpu.memory_space<vmem>>, %arg10: memref<128x128xf32, #tpu.memory_space<vmem>>, %arg11: memref<1x128xf32, #tpu.memory_space<vmem>>, %arg12: memref<1x8x128xf32, #tpu.memory_space<vmem>>, %arg13: memref<8x128xf32, #tpu.memory_space<vmem>>, %arg14: memref<8x1xf32, #tpu.memory_space<vmem>>, %arg15: memref<8x1xf32, #tpu.memory_space<vmem>>, %arg16: memref<8x128xf32, #tpu.memory_space<vmem>>) attributes {dimension_semantics = [#tpu.dimension_semantics<parallel>, #tpu.dimension_semantics<parallel>, #tpu.dimension_semantics<arbitrary>], iteration_bounds = array<i64: 2, 1, 1>, scalar_prefetch = 0 : i64, scratch_operands = 4 : i64, tpu.core_type = #tpu.core_type<tc>, window_params = [{transform_indices = @transform_0, window_bounds = array<i64: 1, 8, 128>}, {transform_indices = @transform_1, window_bounds = array<i64: 1, 8, 128>}, {transform_indices = @transform_2, window_bounds = array<i64: 1, 8, 128>}, {pipeline_mode = #tpu.pipeline_mode<synchronous>, transform_indices = @transform_3, window_bounds = array<i64: 128, 128>}, {pipeline_mode = #tpu.pipeline_mode<synchronous>, transform_indices = @transform_4, window_bounds = array<i64: 1, 128>}, {pipeline_mode = #tpu.pipeline_mode<synchronous>, transform_indices = @transform_5, window_bounds = array<i64: 128, 128>}, {pipeline_mode = #tpu.pipeline_mode<synchronous>, transform_indices = @transform_6, window_bounds = array<i64: 1, 128>}, {pipeline_mode = #tpu.pipeline_mode<synchronous>, transform_indices = @transform_7, window_bounds = array<i64: 128, 128>}, {pipeline_mode = #tpu.pipeline_mode<synchronous>, transform_indices = @transform_8, window_bounds = array<i64: 1, 128>}, {transform_indices = @transform_9, window_bounds = array<i64: 1, 8, 128>}]} {
    %c0_i32 = arith.constant 0 : i32
    %0 = arith.cmpi eq, %arg2, %c0_i32 : i32
    %1 = arith.extui %0 : i1 to i32
    %c0_i32_0 = arith.constant 0 : i32
    %2 = arith.cmpi ne, %1, %c0_i32_0 : i32
    scf.if %2 {
      %c0_35 = arith.constant 0 : index
      %c0_36 = arith.constant 0 : index
      %c0_37 = arith.constant 0 : index
      %44 = vector.load %arg3[%c0_35, %c0_36, %c0_37] : memref<1x8x128xf32, #tpu.memory_space<vmem>>, vector<1x8x128xf32>
      %45 = vector.shape_cast %44 : vector<1x8x128xf32> to vector<8x128xf32>
      %c0_38 = arith.constant 0 : index
      %c0_39 = arith.constant 0 : index
      %46 = vector.load %arg6[%c0_38, %c0_39] : memref<128x128xf32, #tpu.memory_space<vmem>>, vector<128x128xf32>
      %cst_40 = arith.constant dense<0.000000e+00> : vector<8x128xf32>
      %47 = tpu.matmul %45, %46, %cst_40 {dimension_numbers = #tpu.dot_dimension_numbers<[1], [0], [0], [1], [0, 0, 1, 1], [], []>} : vector<8x128xf32>, vector<128x128xf32>, vector<8x128xf32> -> vector<8x128xf32>
      %c0_41 = arith.constant 0 : index
      %c0_42 = arith.constant 0 : index
      %48 = vector.load %arg7[%c0_41, %c0_42] : memref<1x128xf32, #tpu.memory_space<vmem>>, vector<1x128xf32>
      %49 = vector.broadcast %48 : vector<1x128xf32> to vector<8x128xf32>
      %50 = arith.addf %47, %49 : vector<8x128xf32>
      %cst_43 = arith.constant 0.176776692 : f32
      %51 = vector.broadcast %cst_43 : f32 to vector<8x128xf32>
      %52 = arith.mulf %50, %51 : vector<8x128xf32>
      %c0_44 = arith.constant 0 : index
      %c0_45 = arith.constant 0 : index
      %53 = vector.load %arg13[%c0_44, %c0_45] : memref<8x128xf32, #tpu.memory_space<vmem>>, vector<8x128xf32>
      tpu.vector_store %arg13[%c0_44, %c0_45], %52 {strides = array<i32>} : memref<8x128xf32, #tpu.memory_space<vmem>>, vector<8x128xf32>,
      %cst_46 = arith.constant -1.000000e+30 : f32
      %54 = vector.broadcast %cst_46 : f32 to vector<8x1xf32>
      %c0_47 = arith.constant 0 : index
      %c0_48 = arith.constant 0 : index
      %55 = vector.load %arg14[%c0_47, %c0_48] : memref<8x1xf32, #tpu.memory_space<vmem>>, vector<8x1xf32>
      tpu.vector_store %arg14[%c0_47, %c0_48], %54 {strides = array<i32>} : memref<8x1xf32, #tpu.memory_space<vmem>>, vector<8x1xf32>,
      %cst_49 = arith.constant 0.000000e+00 : f32
      %56 = vector.broadcast %cst_49 : f32 to vector<8x1xf32>
      %c0_50 = arith.constant 0 : index
      %c0_51 = arith.constant 0 : index
      %57 = vector.load %arg15[%c0_50, %c0_51] : memref<8x1xf32, #tpu.memory_space<vmem>>, vector<8x1xf32>
      tpu.vector_store %arg15[%c0_50, %c0_51], %56 {strides = array<i32>} : memref<8x1xf32, #tpu.memory_space<vmem>>, vector<8x1xf32>,
      %cst_52 = arith.constant 0.000000e+00 : f32
      %58 = vector.broadcast %cst_52 : f32 to vector<8x128xf32>
      %c0_53 = arith.constant 0 : index
      %c0_54 = arith.constant 0 : index
      %59 = vector.load %arg16[%c0_53, %c0_54] : memref<8x128xf32, #tpu.memory_space<vmem>>, vector<8x128xf32>
      tpu.vector_store %arg16[%c0_53, %c0_54], %58 {strides = array<i32>} : memref<8x128xf32, #tpu.memory_space<vmem>>, vector<8x128xf32>,
    } else {
    }
    %c0 = arith.constant 0 : index
    %c0_1 = arith.constant 0 : index
    %c0_2 = arith.constant 0 : index
    %3 = vector.load %arg4[%c0, %c0_1, %c0_2] : memref<1x8x128xf32, #tpu.memory_space<vmem>>, vector<1x8x128xf32>
    %4 = vector.shape_cast %3 : vector<1x8x128xf32> to vector<8x128xf32>
    %c0_3 = arith.constant 0 : index
    %c0_4 = arith.constant 0 : index
    %5 = vector.load %arg8[%c0_3, %c0_4] : memref<128x128xf32, #tpu.memory_space<vmem>>, vector<128x128xf32>
    %cst = arith.constant dense<0.000000e+00> : vector<8x128xf32>
    %6 = tpu.matmul %4, %5, %cst {dimension_numbers = #tpu.dot_dimension_numbers<[1], [0], [0], [1], [0, 0, 1, 1], [], []>} : vector<8x128xf32>, vector<128x128xf32>, vector<8x128xf32> -> vector<8x128xf32>
    %c0_5 = arith.constant 0 : index
    %c0_6 = arith.constant 0 : index
    %7 = vector.load %arg9[%c0_5, %c0_6] : memref<1x128xf32, #tpu.memory_space<vmem>>, vector<1x128xf32>
    %8 = vector.broadcast %7 : vector<1x128xf32> to vector<8x128xf32>
    %9 = arith.addf %6, %8 : vector<8x128xf32>
    %c0_7 = arith.constant 0 : index
    %c0_8 = arith.constant 0 : index
    %c0_9 = arith.constant 0 : index
    %10 = vector.load %arg5[%c0_7, %c0_8, %c0_9] : memref<1x8x128xf32, #tpu.memory_space<vmem>>, vector<1x8x128xf32>
    %11 = vector.shape_cast %10 : vector<1x8x128xf32> to vector<8x128xf32>
    %c0_10 = arith.constant 0 : index
    %c0_11 = arith.constant 0 : index
    %12 = vector.load %arg10[%c0_10, %c0_11] : memref<128x128xf32, #tpu.memory_space<vmem>>, vector<128x128xf32>
    %cst_12 = arith.constant dense<0.000000e+00> : vector<8x128xf32>
    %13 = tpu.matmul %11, %12, %cst_12 {dimension_numbers = #tpu.dot_dimension_numbers<[1], [0], [0], [1], [0, 0, 1, 1], [], []>} : vector<8x128xf32>, vector<128x128xf32>, vector<8x128xf32> -> vector<8x128xf32>
    %c0_13 = arith.constant 0 : index
    %c0_14 = arith.constant 0 : index
    %14 = vector.load %arg11[%c0_13, %c0_14] : memref<1x128xf32, #tpu.memory_space<vmem>>, vector<1x128xf32>
    %15 = vector.broadcast %14 : vector<1x128xf32> to vector<8x128xf32>
    %16 = arith.addf %13, %15 : vector<8x128xf32>
    %c0_15 = arith.constant 0 : index
    %c0_16 = arith.constant 0 : index
    %17 = vector.load %arg13[%c0_15, %c0_16] : memref<8x128xf32, #tpu.memory_space<vmem>>, vector<8x128xf32>
    %cst_17 = arith.constant dense<0.000000e+00> : vector<8x8xf32>
    %18 = tpu.matmul %17, %9, %cst_17 {dimension_numbers = #tpu.dot_dimension_numbers<[1], [1], [0], [0], [0, 0, 1, 0], [], []>} : vector<8x128xf32>, vector<8x128xf32>, vector<8x8xf32> -> vector<8x8xf32>
    %c0_18 = arith.constant 0 : index
    %c0_19 = arith.constant 0 : index
    %19 = vector.load %arg14[%c0_18, %c0_19] : memref<8x1xf32, #tpu.memory_space<vmem>>, vector<8x1xf32>
    %cst_20 = arith.constant dense<0xFF800000> : vector<8xf32>
    %20 = vector.multi_reduction <maximumf>, %18, %cst_20 [1] : vector<8x8xf32> to vector<8xf32>
    %21 = vector.shape_cast %20 : vector<8xf32> to vector<8x1xf32>
    %22 = arith.maximumf %19, %21 : vector<8x1xf32>
    %23 = arith.subf %19, %22 : vector<8x1xf32>
    %24 = math.exp %23 : vector<8x1xf32>
    %25 = vector.broadcast %22 : vector<8x1xf32> to vector<8x8xf32>
    %26 = arith.subf %18, %25 : vector<8x8xf32>
    %27 = math.exp %26 : vector<8x8xf32>
    %c0_21 = arith.constant 0 : index
    %c0_22 = arith.constant 0 : index
    %28 = vector.load %arg15[%c0_21, %c0_22] : memref<8x1xf32, #tpu.memory_space<vmem>>, vector<8x1xf32>
    %29 = arith.mulf %24, %28 : vector<8x1xf32>
    %cst_23 = arith.constant dense<0.000000e+00> : vector<8xf32>
    %30 = vector.multi_reduction <add>, %27, %cst_23 [1] : vector<8x8xf32> to vector<8xf32>
    %31 = vector.shape_cast %30 : vector<8xf32> to vector<8x1xf32>
    %32 = arith.addf %29, %31 : vector<8x1xf32>
    %c0_24 = arith.constant 0 : index
    %c0_25 = arith.constant 0 : index
    %33 = vector.load %arg15[%c0_24, %c0_25] : memref<8x1xf32, #tpu.memory_space<vmem>>, vector<8x1xf32>
    tpu.vector_store %arg15[%c0_24, %c0_25], %32 {strides = array<i32>} : memref<8x1xf32, #tpu.memory_space<vmem>>, vector<8x1xf32>,
    %c0_26 = arith.constant 0 : index
    %c0_27 = arith.constant 0 : index
    %34 = vector.load %arg16[%c0_26, %c0_27] : memref<8x128xf32, #tpu.memory_space<vmem>>, vector<8x128xf32>
    %35 = vector.broadcast %24 : vector<8x1xf32> to vector<8x128xf32>
    %36 = arith.mulf %35, %34 : vector<8x128xf32>
    %cst_28 = arith.constant dense<0.000000e+00> : vector<8x128xf32>
    %37 = tpu.matmul %27, %16, %cst_28 {dimension_numbers = #tpu.dot_dimension_numbers<[1], [0], [0], [1], [0, 0, 1, 1], [], []>} : vector<8x8xf32>, vector<8x128xf32>, vector<8x128xf32> -> vector<8x128xf32>
    %38 = arith.addf %36, %37 : vector<8x128xf32>
    %c0_29 = arith.constant 0 : index
    %c0_30 = arith.constant 0 : index
    %39 = vector.load %arg16[%c0_29, %c0_30] : memref<8x128xf32, #tpu.memory_space<vmem>>, vector<8x128xf32>
    tpu.vector_store %arg16[%c0_29, %c0_30], %38 {strides = array<i32>} : memref<8x128xf32, #tpu.memory_space<vmem>>, vector<8x128xf32>,
    %c0_31 = arith.constant 0 : index
    %c0_32 = arith.constant 0 : index
    %40 = vector.load %arg14[%c0_31, %c0_32] : memref<8x1xf32, #tpu.memory_space<vmem>>, vector<8x1xf32>
    tpu.vector_store %arg14[%c0_31, %c0_32], %22 {strides = array<i32>} : memref<8x1xf32, #tpu.memory_space<vmem>>, vector<8x1xf32>,
    %c0_i32_33 = arith.constant 0 : i32
    %41 = arith.cmpi eq, %arg2, %c0_i32_33 : i32
    %42 = arith.extui %41 : i1 to i32
    %c0_i32_34 = arith.constant 0 : i32
    %43 = arith.cmpi ne, %42, %c0_i32_34 : i32
    scf.if %43 {
      %c0_35 = arith.constant 0 : index
      %c0_36 = arith.constant 0 : index
      %44 = vector.load %arg15[%c0_35, %c0_36] : memref<8x1xf32, #tpu.memory_space<vmem>>, vector<8x1xf32>
      %45 = tpu.reciprocal %44 {approx = true} : vector<8x1xf32> -> vector<8x1xf32>
      %46 = arith.mulf %44, %45 : vector<8x1xf32>
      %cst_37 = arith.constant 2.000000e+00 : f32
      %47 = vector.broadcast %cst_37 : f32 to vector<8x1xf32>
      %48 = arith.subf %47, %46 : vector<8x1xf32>
      %49 = arith.mulf %45, %48 : vector<8x1xf32>
      %c0_38 = arith.constant 0 : index
      %c0_39 = arith.constant 0 : index
      %50 = vector.load %arg16[%c0_38, %c0_39] : memref<8x128xf32, #tpu.memory_space<vmem>>, vector<8x128xf32>
      %51 = vector.broadcast %49 : vector<8x1xf32> to vector<8x128xf32>
      %52 = arith.mulf %50, %51 : vector<8x128xf32>
      %c0_40 = arith.constant 0 : index
      %c0_41 = arith.constant 0 : index
      %c0_42 = arith.constant 0 : index
      %53 = vector.load %arg12[%c0_40, %c0_41, %c0_42] : memref<1x8x128xf32, #tpu.memory_space<vmem>>, vector<1x8x128xf32>
      %54 = vector.shape_cast %53 : vector<1x8x128xf32> to vector<8x128xf32>
      %55 = vector.shape_cast %52 : vector<8x128xf32> to vector<1x8x128xf32>
      tpu.vector_store %arg12[%c0_40, %c0_41, %c0_42], %55 {strides = array<i32>} : memref<1x8x128xf32, #tpu.memory_space<vmem>>, vector<1x8x128xf32>,
    } else {
    }
    return
  }
  func.func @transform_0(%arg0: i32, %arg1: i32, %arg2: i32) -> (i32, i32, i32) {
    %c0_i32 = arith.constant 0 : i32
    %c0_i32_0 = arith.constant 0 : i32
    return %arg0, %arg1, %c0_i32 : i32, i32, i32
  }
  func.func @transform_1(%arg0: i32, %arg1: i32, %arg2: i32) -> (i32, i32, i32) {
    %c0_i32 = arith.constant 0 : i32
    %c0_i32_0 = arith.constant 0 : i32
    return %arg0, %arg2, %c0_i32 : i32, i32, i32
  }
  func.func @transform_2(%arg0: i32, %arg1: i32, %arg2: i32) -> (i32, i32, i32) {
    %c0_i32 = arith.constant 0 : i32
    %c0_i32_0 = arith.constant 0 : i32
    return %arg0, %arg2, %c0_i32 : i32, i32, i32
  }
  func.func @transform_3(%arg0: i32, %arg1: i32, %arg2: i32) -> (i32, i32) {
    %c0_i32 = arith.constant 0 : i32
    %c0_i32_0 = arith.constant 0 : i32
    %c0_i32_1 = arith.constant 0 : i32
    return %c0_i32, %c0_i32_0 : i32, i32
  }
  func.func @transform_4(%arg0: i32, %arg1: i32, %arg2: i32) -> (i32, i32) {
    %c0_i32 = arith.constant 0 : i32
    %c0_i32_0 = arith.constant 0 : i32
    %c0_i32_1 = arith.constant 0 : i32
    return %c0_i32, %c0_i32_0 : i32, i32
  }
  func.func @transform_5(%arg0: i32, %arg1: i32, %arg2: i32) -> (i32, i32) {
    %c0_i32 = arith.constant 0 : i32
    %c0_i32_0 = arith.constant 0 : i32
    %c0_i32_1 = arith.constant 0 : i32
    return %c0_i32, %c0_i32_0 : i32, i32
  }
  func.func @transform_6(%arg0: i32, %arg1: i32, %arg2: i32) -> (i32, i32) {
    %c0_i32 = arith.constant 0 : i32
    %c0_i32_0 = arith.constant 0 : i32
    %c0_i32_1 = arith.constant 0 : i32
    return %c0_i32, %c0_i32_0 : i32, i32
  }
  func.func @transform_7(%arg0: i32, %arg1: i32, %arg2: i32) -> (i32, i32) {
    %c0_i32 = arith.constant 0 : i32
    %c0_i32_0 = arith.constant 0 : i32
    %c0_i32_1 = arith.constant 0 : i32
    return %c0_i32, %c0_i32_0 : i32, i32
  }
  func.func @transform_8(%arg0: i32, %arg1: i32, %arg2: i32) -> (i32, i32) {
    %c0_i32 = arith.constant 0 : i32
    %c0_i32_0 = arith.constant 0 : i32
    %c0_i32_1 = arith.constant 0 : i32
    return %c0_i32, %c0_i32_0 : i32, i32
  }
  func.func @transform_9(%arg0: i32, %arg1: i32, %arg2: i32) -> (i32, i32, i32) {
    %c0_i32 = arith.constant 0 : i32
    %c0_i32_0 = arith.constant 0 : i32
    return %arg0, %arg1, %c0_i32 : i32, i32, i32
  }
}

</mosaic_0001>

<llo_original>
// kernel: tpu_custom_call.1
$region0: #{tpu_custom_call.1}
  #allocation0 [shape = 'u32[]', space=smem, size = 0x4, offset = 0x4, fixed_abs, tag = 'smem constant byte address 0x4 - core index']
  #allocation1 [shape = 'u32[72,128]{1,0:T(1,128)}', space=vmem, size = 0x9000, scoped, tag = 'internal scratch']
  #allocation2 [shape = 'f32[8,128]{1,0:T(8,128)}', space=vmem, size = 0x1000, scoped, tag = 'scratch operand']
  #allocation3 [shape = 'f32[8,1]{1,0:T(8,128)}', space=vmem, size = 0x1000, scoped, tag = 'scratch operand']
  #allocation4 [shape = 'f32[8,1]{1,0:T(8,128)}', space=vmem, size = 0x1000, scoped, tag = 'scratch operand']
  #allocation5 [shape = 'f32[8,128]{1,0:T(8,128)}', space=vmem, size = 0x1000, scoped, tag = 'scratch operand']
  %s0 = inlined_call_operand.hbm [shape: f32[2,8,128], index: 0, kind: input, shape index: {}]
  %s1 = inlined_call_operand.hbm [shape: f32[2,8,128], index: 1, kind: input, shape index: {}]
  %s2 = inlined_call_operand.hbm [shape: f32[2,8,128], index: 2, kind: input, shape index: {}]
  %s3 = inlined_call_operand.hbm [shape: f32[128,128], index: 3, kind: input, shape index: {}]
  %s4 = inlined_call_operand.vmem [shape: f32[1,128], index: 4, kind: input, shape index: {}]
  %s5 = inlined_call_operand.hbm [shape: f32[128,128], index: 5, kind: input, shape index: {}]
  %s6 = inlined_call_operand.vmem [shape: f32[1,128], index: 6, kind: input, shape index: {}]
  %s7 = inlined_call_operand.hbm [shape: f32[128,128], index: 7, kind: input, shape index: {}]
  %s8 = inlined_call_operand.vmem [shape: f32[1,128], index: 8, kind: input, shape index: {}]
  %s9 = inlined_call_operand.hbm [shape: f32[2,8,128], index: 9, kind: output, shape index: {}]
  %s10 = sld [smem:[#allocation0]]
  $region101: #{tpu_custom_call.1} parent=0
    _
  %s12 = ssub.s32 1, %s10
  %s13 = scalar_select 0, %s12, %s10
  $region1: #{tpu_custom_call.1} parent=0
    #allocation6 [shape = 'u8[8192]{0}', space=vmem, size = 0x2000, scoped, tag = 'input window, operand 0']
    #allocation7 [shape = 's32[2]{0}', space=sflag, size = 0x8, scoped, tag = 'scoped memory for tpu_custom_call.1']
    #allocation8 [shape = 's32[2]{0}', space=sflag, size = 0x8, scoped, tag = 'scoped memory for tpu_custom_call.1']
    #allocation9 [shape = 'u8[8192]{0}', space=vmem, size = 0x2000, scoped, tag = 'input window, operand 1']
    #allocation10 [shape = 's32[2]{0}', space=sflag, size = 0x8, scoped, tag = 'scoped memory for tpu_custom_call.1']
    #allocation11 [shape = 'u8[8192]{0}', space=vmem, size = 0x2000, scoped, tag = 'input window, operand 2']
    #allocation12 [shape = 'u8[65536]{0}', space=vmem, size = 0x10000, scoped, tag = 'input window, operand 3, single buffered']
    #allocation13 [shape = 's32[1]{0}', space=sflag, size = 0x4, scoped, tag = 'scoped memory for tpu_custom_call.1']
    #allocation14 [shape = 'u8[65536]{0}', space=vmem, size = 0x10000, scoped, tag = 'input window, operand 5, single buffered']
    #allocation15 [shape = 'u8[65536]{0}', space=vmem, size = 0x10000, scoped, tag = 'input window, operand 7, single buffered']
    #allocation16 [shape = 's32[1]{0}', space=sflag, size = 0x4, scoped, tag = 'scoped memory for tpu_custom_call.1']
    #allocation17 [shape = 'u8[8192]{0}', space=vmem, size = 0x2000, scoped, tag = 'output window, operand 0']
    %14 = vsyncpa [#allocation7], 0
    %s15 = scalar_lea.sflag [#allocation7], 1
    %16 = vsyncpa %s15, 0
    %17 = vsyncpa [#allocation10], 0
    %s18 = scalar_lea.sflag [#allocation10], 1
    %19 = vsyncpa %s18, 0
    %20 = vsyncpa [#allocation13], 0
    %21 = vsyncpa [#allocation16], 0
    %22 = vsyncpa [#allocation8], 0
    %s23 = scalar_lea.sflag [#allocation8], 1
    %24 = vsyncpa %s23, 0
    loop: start=0, step=1, limit=4
    $region2: #{tpu_custom_call.1} parent=1 // loop_pre_header
      _
    $region3: #{tpu_custom_call.1} parent=1 // loop_header
      %s26 = sphi 0, %s30
      %p27 = scmp.ge.s32.totalorder %s26, 4
      %s33 = sphi 0, %s52
      %s34 = sphi 0, %s48
      %s35 = sphi 0, %s44
      %s36 = sphi 0, %s33
      %s37 = sphi 0, %s34
      %s38 = sphi 0, %s35
      %s39 = sphi 0, %s36
      %s40 = sphi 0, %s37
      %s41 = sphi 0, %s38
      %s57 = sphi 0, %s59
      %s60 = sphi 0, %s57
      %s61 = sphi 0, %s60
      %s77 = sphi 0, %s61
      %s85 = sphi 0, %s87
      %s88 = sphi 0, %s85
      %s89 = sphi 0, %s88
      %s105 = sphi 0, %s89
      %s113 = sphi 0, %s115
      %s116 = sphi 0, %s113
      %s117 = sphi 0, %s116
      %s133 = sphi 0, %s117
      %s137 = sphi 0, %s137
      %s139 = sphi 0, %s137
      %s140 = sphi 0, %s139
      %s154 = sphi 0, %s140
      %s158 = sphi 0, %s158
      %s160 = sphi 0, %s158
      %s161 = sphi 0, %s160
      %s175 = sphi 0, %s161
      %s179 = sphi 0, %s179
      %s181 = sphi 0, %s179
      %s182 = sphi 0, %s181
      %s196 = sphi 0, %s182
      %s200 = sphi 0, %s200
      %s202 = sphi 0, %s200
      %s203 = sphi 0, %s202
      %s217 = sphi 0, %s203
      %s221 = sphi 0, %s221
      %s223 = sphi 0, %s221
      %s224 = sphi 0, %s223
      %s238 = sphi 0, %s224
      %s242 = sphi 0, %s242
      %s244 = sphi 0, %s242
      %s245 = sphi 0, %s244
      %s259 = sphi 0, %s245
      %s267 = sphi 0, %s269
      %s270 = sphi 0, %s267
      %s271 = sphi 0, %s270
      %s287 = sphi 0, %s271
    $region4: #{tpu_custom_call.1} parent=1 // loop_header_branch
      %29 = sbr.rel (%p27) target = $region8
    $region5: #{tpu_custom_call.1} parent=1 // loop_body
      %s31 = ssub.s32 %s26, 1
      %s32 = ssub.s32 %s26, 2
      %s42 = sadd.s32 1, %s35
      %p43 = scmp.ge.s32.totalorder %s42, 1
      %s44 = scalar_select %p43, 0, %s42
      %s45 = sadd.s32 1, %s34
      %s46 = scalar_select %p43, %s45, %s34
      %p47 = scmp.ge.s32.totalorder %s46, 1
      %s48 = scalar_select %p47, 0, %s46
      %s49 = sadd.s32 1, %s33
      %s50 = scalar_select %p47, %s49, %s33
      %p51 = scmp.ge.s32.totalorder %s50, 2
      %s52 = scalar_select %p51, 0, %s50
      %s53 = ssub.s32 %s33, %s52
      %s54 = ssub.s32 %s34, %s48
      %s55 = sor.u32 %s53, %s54
      %p56 = scmp.eq.s32.totalorder %s55, 0
      %s58 = sadd.s32 %s57, 1
      %s59 = scalar_select %p56, %s57, %s58
      %p62 = pneg %p56
      %p63 = scmp.eq.s32.totalorder %s26, 1
      %p64 = por %p62, %p63
      %p65 = scmp.ne.s32.totalorder %s57, %s60
      %p66 = scmp.eq.s32.totalorder %s26, 0
      %p67 = por %p65, %p66
      %p68 = scmp.ne.s32.totalorder %s57, %s60
      %p69 = scmp.eq.s32.totalorder %s31, 1
      %p70 = por %p68, %p69
      %p71 = scmp.ne.s32.totalorder %s60, %s61
      %p72 = scmp.eq.s32.totalorder %s31, 0
      %p73 = por %p71, %p72
      %p74 = scmp.ne.s32.totalorder %s60, %s61
      %p75 = scmp.eq.s32.totalorder %s32, 1
      %p76 = por %p74, %p75
      %p78 = scmp.ne.s32.totalorder %s61, %s77
      %p79 = scmp.eq.s32.totalorder %s32, 0
      %p80 = por %p78, %p79
      %s81 = ssub.s32 %s33, %s52
      %s82 = ssub.s32 %s35, %s44
      %s83 = sor.u32 %s81, %s82
      %p84 = scmp.eq.s32.totalorder %s83, 0
      %s86 = sadd.s32 %s85, 1
      %s87 = scalar_select %p84, %s85, %s86
      %p90 = pneg %p84
      %p91 = scmp.eq.s32.totalorder %s26, 1
      %p92 = por %p90, %p91
      %p93 = scmp.ne.s32.totalorder %s85, %s88
      %p94 = scmp.eq.s32.totalorder %s26, 0
      %p95 = por %p93, %p94
      %p96 = scmp.ne.s32.totalorder %s85, %s88
      %p97 = scmp.eq.s32.totalorder %s31, 1
      %p98 = por %p96, %p97
      %p99 = scmp.ne.s32.totalorder %s88, %s89
      %p100 = scmp.eq.s32.totalorder %s31, 0
      %p101 = por %p99, %p100
      %p102 = scmp.ne.s32.totalorder %s88, %s89
      %p103 = scmp.eq.s32.totalorder %s32, 1
      %p104 = por %p102, %p103
      %p106 = scmp.ne.s32.totalorder %s89, %s105
      %p107 = scmp.eq.s32.totalorder %s32, 0
      %p108 = por %p106, %p107
      %s109 = ssub.s32 %s33, %s52
      %s110 = ssub.s32 %s35, %s44
      %s111 = sor.u32 %s109, %s110
      %p112 = scmp.eq.s32.totalorder %s111, 0
      %s114 = sadd.s32 %s113, 1
      %s115 = scalar_select %p112, %s113, %s114
      %p118 = pneg %p112
      %p119 = scmp.eq.s32.totalorder %s26, 1
      %p120 = por %p118, %p119
      %p121 = scmp.ne.s32.totalorder %s113, %s116
      %p122 = scmp.eq.s32.totalorder %s26, 0
      %p123 = por %p121, %p122
      %p124 = scmp.ne.s32.totalorder %s113, %s116
      %p125 = scmp.eq.s32.totalorder %s31, 1
      %p126 = por %p124, %p125
      %p127 = scmp.ne.s32.totalorder %s116, %s117
      %p128 = scmp.eq.s32.totalorder %s31, 0
      %p129 = por %p127, %p128
      %p130 = scmp.ne.s32.totalorder %s116, %s117
      %p131 = scmp.eq.s32.totalorder %s32, 1
      %p132 = por %p130, %p131
      %p134 = scmp.ne.s32.totalorder %s117, %s133
      %p135 = scmp.eq.s32.totalorder %s32, 0
      %p136 = por %p134, %p135
      %s138 = sadd.s32 %s137, 1
      %p141 = scmp.eq.s32.totalorder %s26, 1
      %p142 = scmp.ne.s32.totalorder %s137, %s139
      %p143 = scmp.eq.s32.totalorder %s26, 0
      %p144 = por %p142, %p143
      %p145 = scmp.ne.s32.totalorder %s137, %s139
      %p146 = scmp.eq.s32.totalorder %s31, 1
      %p147 = por %p145, %p146
      %p148 = scmp.ne.s32.totalorder %s139, %s140
      %p149 = scmp.eq.s32.totalorder %s31, 0
      %p150 = por %p148, %p149
      %p151 = scmp.ne.s32.totalorder %s139, %s140
      %p152 = scmp.eq.s32.totalorder %s32, 1
      %p153 = por %p151, %p152
      %p155 = scmp.ne.s32.totalorder %s140, %s154
      %p156 = scmp.eq.s32.totalorder %s32, 0
      %p157 = por %p155, %p156
      %s159 = sadd.s32 %s158, 1
      %p162 = scmp.eq.s32.totalorder %s26, 1
      %p163 = scmp.ne.s32.totalorder %s158, %s160
      %p164 = scmp.eq.s32.totalorder %s26, 0
      %p165 = por %p163, %p164
      %p166 = scmp.ne.s32.totalorder %s158, %s160
      %p167 = scmp.eq.s32.totalorder %s31, 1
      %p168 = por %p166, %p167
      %p169 = scmp.ne.s32.totalorder %s160, %s161
      %p170 = scmp.eq.s32.totalorder %s31, 0
      %p171 = por %p169, %p170
      %p172 = scmp.ne.s32.totalorder %s160, %s161
      %p173 = scmp.eq.s32.totalorder %s32, 1
      %p174 = por %p172, %p173
      %p176 = scmp.ne.s32.totalorder %s161, %s175
      %p177 = scmp.eq.s32.totalorder %s32, 0
      %p178 = por %p176, %p177
      %s180 = sadd.s32 %s179, 1
      %p183 = scmp.eq.s32.totalorder %s26, 1
      %p184 = scmp.ne.s32.totalorder %s179, %s181
      %p185 = scmp.eq.s32.totalorder %s26, 0
      %p186 = por %p184, %p185
      %p187 = scmp.ne.s32.totalorder %s179, %s181
      %p188 = scmp.eq.s32.totalorder %s31, 1
      %p189 = por %p187, %p188
      %p190 = scmp.ne.s32.totalorder %s181, %s182
      %p191 = scmp.eq.s32.totalorder %s31, 0
      %p192 = por %p190, %p191
      %p193 = scmp.ne.s32.totalorder %s181, %s182
      %p194 = scmp.eq.s32.totalorder %s32, 1
      %p195 = por %p193, %p194
      %p197 = scmp.ne.s32.totalorder %s182, %s196
      %p198 = scmp.eq.s32.totalorder %s32, 0
      %p199 = por %p197, %p198
      %s201 = sadd.s32 %s200, 1
      %p204 = scmp.eq.s32.totalorder %s26, 1
      %p205 = scmp.ne.s32.totalorder %s200, %s202
      %p206 = scmp.eq.s32.totalorder %s26, 0
      %p207 = por %p205, %p206
      %p208 = scmp.ne.s32.totalorder %s200, %s202
      %p209 = scmp.eq.s32.totalorder %s31, 1
      %p210 = por %p208, %p209
      %p211 = scmp.ne.s32.totalorder %s202, %s203
      %p212 = scmp.eq.s32.totalorder %s31, 0
      %p213 = por %p211, %p212
      %p214 = scmp.ne.s32.totalorder %s202, %s203
      %p215 = scmp.eq.s32.totalorder %s32, 1
      %p216 = por %p214, %p215
      %p218 = scmp.ne.s32.totalorder %s203, %s217
      %p219 = scmp.eq.s32.totalorder %s32, 0
      %p220 = por %p218, %p219
      %s222 = sadd.s32 %s221, 1
      %p225 = scmp.eq.s32.totalorder %s26, 1
      %p226 = scmp.ne.s32.totalorder %s221, %s223
      %p227 = scmp.eq.s32.totalorder %s26, 0
      %p228 = por %p226, %p227
      %p229 = scmp.ne.s32.totalorder %s221, %s223
      %p230 = scmp.eq.s32.totalorder %s31, 1
      %p231 = por %p229, %p230
      %p232 = scmp.ne.s32.totalorder %s223, %s224
      %p233 = scmp.eq.s32.totalorder %s31, 0
      %p234 = por %p232, %p233
      %p235 = scmp.ne.s32.totalorder %s223, %s224
      %p236 = scmp.eq.s32.totalorder %s32, 1
      %p237 = por %p235, %p236
      %p239 = scmp.ne.s32.totalorder %s224, %s238
      %p240 = scmp.eq.s32.totalorder %s32, 0
      %p241 = por %p239, %p240
      %s243 = sadd.s32 %s242, 1
      %p246 = scmp.eq.s32.totalorder %s26, 1
      %p247 = scmp.ne.s32.totalorder %s242, %s244
      %p248 = scmp.eq.s32.totalorder %s26, 0
      %p249 = por %p247, %p248
      %p250 = scmp.ne.s32.totalorder %s242, %s244
      %p251 = scmp.eq.s32.totalorder %s31, 1
      %p252 = por %p250, %p251
      %p253 = scmp.ne.s32.totalorder %s244, %s245
      %p254 = scmp.eq.s32.totalorder %s31, 0
      %p255 = por %p253, %p254
      %p256 = scmp.ne.s32.totalorder %s244, %s245
      %p257 = scmp.eq.s32.totalorder %s32, 1
      %p258 = por %p256, %p257
      %p260 = scmp.ne.s32.totalorder %s245, %s259
      %p261 = scmp.eq.s32.totalorder %s32, 0
      %p262 = por %p260, %p261
      %s263 = ssub.s32 %s33, %s52
      %s264 = ssub.s32 %s34, %s48
      %s265 = sor.u32 %s263, %s264
      %p266 = scmp.eq.s32.totalorder %s265, 0
      %s268 = sadd.s32 %s267, 1
      %s269 = scalar_select %p266, %s267, %s268
      %p272 = pneg %p266
      %p273 = scmp.eq.s32.totalorder %s26, 1
      %p274 = por %p272, %p273
      %p275 = scmp.ne.s32.totalorder %s267, %s270
      %p276 = scmp.eq.s32.totalorder %s26, 0
      %p277 = por %p275, %p276
      %p278 = scmp.ne.s32.totalorder %s267, %s270
      %p279 = scmp.eq.s32.totalorder %s31, 1
      %p280 = por %p278, %p279
      %p281 = scmp.ne.s32.totalorder %s270, %s271
      %p282 = scmp.eq.s32.totalorder %s31, 0
      %p283 = por %p281, %p282
      %p284 = scmp.ne.s32.totalorder %s270, %s271
      %p285 = scmp.eq.s32.totalorder %s32, 1
      %p286 = por %p284, %p285
      %p288 = scmp.ne.s32.totalorder %s271, %s287
      %p289 = scmp.eq.s32.totalorder %s32, 0
      %p290 = por %p288, %p289
      %p291 = scmp.le.s32.totalorder 1, %s26
      %p292 = scmp.lt.s32.totalorder %s26, 3
      %p293 = pnand %p291, %p292
      %p294 = pneg %p293
      // Predicated region
      $region9: #{tpu_custom_call.1} parent=5 // pred_check
        _
      $region10: #{tpu_custom_call.1} parent=5 // pred_check_branch
        %296 = sbr.rel (%p293) target = $region12
      $region11: #{tpu_custom_call.1} parent=5 // pred_region
        %s297 = ssub.s32 %s26, 1
        // Predicated region
        $region13: #{tpu_custom_call.1} parent=11 // pred_check
          %p298 = pneg %p150
        $region14: #{tpu_custom_call.1} parent=11 // pred_check_branch
          %300 = sbr.rel (%p298) target = $region16
        $region15: #{tpu_custom_call.1} parent=11 // pred_region
          %302 = vsyncadd [#allocation13], 0
          %s303 = sshll.u32 %s3, 4
          %s304 = int_to_ptr.hbm [resolvable:$true] %s303
          %s305 = sshll.u32 [#allocation12], 4
          %s306 = int_to_ptr.vmem [resolvable:$true] %s305
          %311 = dma.hbm_to_vmem [thread:$0]  %s304, 2048, %s306, [#allocation13], 128, 128, 8
        $region16: #{tpu_custom_call.1} parent=11 // pred_fallthru
          _
        // Predicated region
        $region17: #{tpu_custom_call.1} parent=11 // pred_check
          %p312 = pneg %p171
        $region18: #{tpu_custom_call.1} parent=11 // pred_check_branch
          %314 = sbr.rel (%p312) target = $region20
        $region19: #{tpu_custom_call.1} parent=11 // pred_region
          _
        $region20: #{tpu_custom_call.1} parent=11 // pred_fallthru
          _
        // Predicated region
        $region21: #{tpu_custom_call.1} parent=11 // pred_check
          %p315 = pneg %p192
        $region22: #{tpu_custom_call.1} parent=11 // pred_check_branch
          %317 = sbr.rel (%p315) target = $region24
        $region23: #{tpu_custom_call.1} parent=11 // pred_region
          %319 = vsyncadd [#allocation13], 0
          %s320 = sshll.u32 %s5, 4
          %s321 = int_to_ptr.hbm [resolvable:$true] %s320
          %s322 = sshll.u32 [#allocation14], 4
          %s323 = int_to_ptr.vmem [resolvable:$true] %s322
          %328 = dma.hbm_to_vmem [thread:$0]  %s321, 2048, %s323, [#allocation13], 128, 128, 8
        $region24: #{tpu_custom_call.1} parent=11 // pred_fallthru
          _
        // Predicated region
        $region25: #{tpu_custom_call.1} parent=11 // pred_check
          %p329 = pneg %p213
        $region26: #{tpu_custom_call.1} parent=11 // pred_check_branch
          %331 = sbr.rel (%p329) target = $region28
        $region27: #{tpu_custom_call.1} parent=11 // pred_region
          _
        $region28: #{tpu_custom_call.1} parent=11 // pred_fallthru
          _
        // Predicated region
        $region29: #{tpu_custom_call.1} parent=11 // pred_check
          %p332 = pneg %p234
        $region30: #{tpu_custom_call.1} parent=11 // pred_check_branch
          %334 = sbr.rel (%p332) target = $region32
        $region31: #{tpu_custom_call.1} parent=11 // pred_region
          %336 = vsyncadd [#allocation16], 0
          %s337 = sshll.u32 %s7, 4
          %s338 = int_to_ptr.hbm [resolvable:$true] %s337
          %s339 = sshll.u32 [#allocation15], 4
          %s340 = int_to_ptr.vmem [resolvable:$true] %s339
          %345 = dma.hbm_to_vmem [thread:$0]  %s338, 2048, %s340, [#allocation16], 128, 128, 8
        $region32: #{tpu_custom_call.1} parent=11 // pred_fallthru
          _
        // Predicated region
        $region33: #{tpu_custom_call.1} parent=11 // pred_check
          %p346 = pneg %p255
        $region34: #{tpu_custom_call.1} parent=11 // pred_check_branch
          %348 = sbr.rel (%p346) target = $region36
        $region35: #{tpu_custom_call.1} parent=11 // pred_region
          _
        $region36: #{tpu_custom_call.1} parent=11 // pred_fallthru
          _
      $region12: #{tpu_custom_call.1} parent=5 // pred_fallthru
        _
      %p349 = scmp.lt.s32.totalorder %s26, 2
      // Predicated region
      $region37: #{tpu_custom_call.1} parent=5 // pred_check
        %p350 = pneg %p349
      $region38: #{tpu_custom_call.1} parent=5 // pred_check_branch
        %352 = sbr.rel (%p350) target = $region40
      $region39: #{tpu_custom_call.1} parent=5 // pred_region
        // Predicated region
        $region41: #{tpu_custom_call.1} parent=39 // pred_check
          %p353 = pneg %p67
        $region42: #{tpu_custom_call.1} parent=39 // pred_check_branch
          %355 = sbr.rel (%p353) target = $region44
        $region43: #{tpu_custom_call.1} parent=39 // pred_region
          %s356 = sand.u32 %s57, 1
          %s357 = scalar_lea.sflag [#allocation7], %s356
          %s358 = sand.u32 %s57, 1
          %s359 = smul.addr %s358, 8
          %s360 = scalar_lea.vmem [#allocation6], %s359
          %362 = vsyncadd %s357, 0
          %s363 = sadd.s32 %s34, %s33
          %s364 = smul.addr %s363, 8
          %s365 = scalar_lea.hbm %s0, %s364
          %s367 = sshll.u32 %s365, 4
          %s368 = int_to_ptr.hbm [resolvable:$true] %s367
          %s369 = sshll.u32 %s360, 4
          %s370 = int_to_ptr.vmem [resolvable:$true] %s369
          %372 = dma.hbm_to_vmem [thread:$0]  %s368, 128, %s370, %s357
        $region44: #{tpu_custom_call.1} parent=39 // pred_fallthru
          _
        // Predicated region
        $region45: #{tpu_custom_call.1} parent=39 // pred_check
          %p373 = pneg %p95
        $region46: #{tpu_custom_call.1} parent=39 // pred_check_branch
          %375 = sbr.rel (%p373) target = $region48
        $region47: #{tpu_custom_call.1} parent=39 // pred_region
          %s376 = sand.u32 %s26, 1
          %s377 = scalar_lea.sflag [#allocation10], %s376
          %s378 = sand.u32 %s85, 1
          %s379 = smul.addr %s378, 8
          %s380 = scalar_lea.vmem [#allocation9], %s379
          %382 = vsyncadd %s377, 0
          %s383 = sadd.s32 %s35, %s33
          %s384 = smul.addr %s383, 8
          %s385 = scalar_lea.hbm %s1, %s384
          %s387 = sshll.u32 %s385, 4
          %s388 = int_to_ptr.hbm [resolvable:$true] %s387
          %s389 = sshll.u32 %s380, 4
          %s390 = int_to_ptr.vmem [resolvable:$true] %s389
          %392 = dma.hbm_to_vmem [thread:$0]  %s388, 128, %s390, %s377
        $region48: #{tpu_custom_call.1} parent=39 // pred_fallthru
          _
        // Predicated region
        $region49: #{tpu_custom_call.1} parent=39 // pred_check
          %p393 = pneg %p123
        $region50: #{tpu_custom_call.1} parent=39 // pred_check_branch
          %395 = sbr.rel (%p393) target = $region52
        $region51: #{tpu_custom_call.1} parent=39 // pred_region
          %s396 = sand.u32 %s26, 1
          %s397 = scalar_lea.sflag [#allocation10], %s396
          %s398 = sand.u32 %s113, 1
          %s399 = smul.addr %s398, 8
          %s400 = scalar_lea.vmem [#allocation11], %s399
          %402 = vsyncadd %s397, 0
          %s403 = sadd.s32 %s35, %s33
          %s404 = smul.addr %s403, 8
          %s405 = scalar_lea.hbm %s2, %s404
          %s407 = sshll.u32 %s405, 4
          %s408 = int_to_ptr.hbm [resolvable:$true] %s407
          %s409 = sshll.u32 %s400, 4
          %s410 = int_to_ptr.vmem [resolvable:$true] %s409
          %412 = dma.hbm_to_vmem [thread:$0]  %s408, 128, %s410, %s397
        $region52: #{tpu_custom_call.1} parent=39 // pred_fallthru
          _
      $region40: #{tpu_custom_call.1} parent=5 // pred_fallthru
        _
      %p413 = scmp.le.s32.totalorder 1, %s26
      %p414 = scmp.lt.s32.totalorder %s26, 3
      %p415 = pnand %p413, %p414
      %p416 = pneg %p415
      // Predicated region
      $region53: #{tpu_custom_call.1} parent=5 // pred_check
        _
      $region54: #{tpu_custom_call.1} parent=5 // pred_check_branch
        %418 = sbr.rel (%p415) target = $region56
      $region55: #{tpu_custom_call.1} parent=5 // pred_region
        %s419 = ssub.s32 %s26, 1
        %s420 = sand.u32 %s60, 1
        %s421 = scalar_lea.sflag [#allocation7], %s420
        %s422 = sand.u32 %s60, 1
        %s423 = smul.addr %s422, 8
        %s424 = scalar_lea.vmem [#allocation6], %s423
        // Predicated region
        $region57: #{tpu_custom_call.1} parent=55 // pred_check
          %p425 = pneg %p73
        $region58: #{tpu_custom_call.1} parent=55 // pred_check_branch
          %427 = sbr.rel (%p425) target = $region60
        $region59: #{tpu_custom_call.1} parent=55 // pred_region
          %429 = dma.done %s421, 128
        $region60: #{tpu_custom_call.1} parent=55 // pred_fallthru
          _
        %s430 = sand.u32 %s31, 1
        %s431 = scalar_lea.sflag [#allocation10], %s430
        %s432 = sand.u32 %s88, 1
        %s433 = smul.addr %s432, 8
        %s434 = scalar_lea.vmem [#allocation9], %s433
        // Predicated region
        $region61: #{tpu_custom_call.1} parent=55 // pred_check
          %p435 = pneg %p101
        $region62: #{tpu_custom_call.1} parent=55 // pred_check_branch
          %437 = sbr.rel (%p435) target = $region64
        $region63: #{tpu_custom_call.1} parent=55 // pred_region
          %439 = dma.done %s431, 128
        $region64: #{tpu_custom_call.1} parent=55 // pred_fallthru
          _
        %s440 = sand.u32 %s31, 1
        %s441 = scalar_lea.sflag [#allocation10], %s440
        %s442 = sand.u32 %s116, 1
        %s443 = smul.addr %s442, 8
        %s444 = scalar_lea.vmem [#allocation11], %s443
        // Predicated region
        $region65: #{tpu_custom_call.1} parent=55 // pred_check
          %p445 = pneg %p129
        $region66: #{tpu_custom_call.1} parent=55 // pred_check_branch
          %447 = sbr.rel (%p445) target = $region68
        $region67: #{tpu_custom_call.1} parent=55 // pred_region
          %449 = dma.done %s441, 128
        $region68: #{tpu_custom_call.1} parent=55 // pred_fallthru
          _
        // Predicated region
        $region69: #{tpu_custom_call.1} parent=55 // pred_check
          %p450 = pneg %p150
        $region70: #{tpu_custom_call.1} parent=55 // pred_check_branch
          %452 = sbr.rel (%p450) target = $region72
        $region71: #{tpu_custom_call.1} parent=55 // pred_region
          %454 = dma.done [#allocation13], 2048
        $region72: #{tpu_custom_call.1} parent=55 // pred_fallthru
          _
        // Predicated region
        $region73: #{tpu_custom_call.1} parent=55 // pred_check
          %p455 = pneg %p192
        $region74: #{tpu_custom_call.1} parent=55 // pred_check_branch
          %457 = sbr.rel (%p455) target = $region76
        $region75: #{tpu_custom_call.1} parent=55 // pred_region
          %459 = dma.done [#allocation13], 2048
        $region76: #{tpu_custom_call.1} parent=55 // pred_fallthru
          _
        // Predicated region
        $region77: #{tpu_custom_call.1} parent=55 // pred_check
          %p460 = pneg %p234
        $region78: #{tpu_custom_call.1} parent=55 // pred_check_branch
          %462 = sbr.rel (%p460) target = $region80
        $region79: #{tpu_custom_call.1} parent=55 // pred_region
          %464 = dma.done [#allocation16], 2048
        $region80: #{tpu_custom_call.1} parent=55 // pred_fallthru
          _
        %s465 = sand.u32 %s60, 1
        %s466 = scalar_lea.sflag [#allocation7], %s465
        %s467 = sand.u32 %s60, 1
        %s468 = smul.addr %s467, 8
        %s469 = scalar_lea.vmem [#allocation6], %s468
        %p470 = pneg %p73
        %p471 = pneg %p70
        %s472 = sand.u32 %s31, 1
        %s473 = scalar_lea.sflag [#allocation10], %s472
        %s474 = sand.u32 %s88, 1
        %s475 = smul.addr %s474, 8
        %s476 = scalar_lea.vmem [#allocation9], %s475
        %p477 = pneg %p101
        %p478 = pneg %p98
        %s479 = sand.u32 %s31, 1
        %s480 = scalar_lea.sflag [#allocation10], %s479
        %s481 = sand.u32 %s116, 1
        %s482 = smul.addr %s481, 8
        %s483 = scalar_lea.vmem [#allocation11], %s482
        %p484 = pneg %p129
        %p485 = pneg %p126
        %p486 = pneg %p150
        %p487 = pneg %p147
        %p488 = pneg %p171
        %p489 = pneg %p168
        %p490 = pneg %p192
        %p491 = pneg %p189
        %p492 = pneg %p213
        %p493 = pneg %p210
        %p494 = pneg %p234
        %p495 = pneg %p231
        %p496 = pneg %p255
        %p497 = pneg %p252
        %p498 = pneg %p283
        %p499 = pneg %p280
        %s500 = sand.u32 %s270, 1
        %s501 = scalar_lea.sflag [#allocation8], %s500
        %s502 = sand.u32 %s270, 1
        %s503 = smul.addr %s502, 8
        %s504 = scalar_lea.vmem [#allocation17], %s503
        %p505 = scmp.eq.s32.totalorder %s38, 0
        // Predicated region
        $region81: #{tpu_custom_call.1} parent=55 // pred_check
          %p506 = pneg %p505
        $region82: #{tpu_custom_call.1} parent=55 // pred_check_branch
          %508 = sbr.rel (%p506) target = $region84
        $region83: #{tpu_custom_call.1} parent=55 // pred_region
          %v509 = vld [vmem:[%s424] sm:$0xff]
          %v510 = vld [vmem:[#allocation12] sm:$0xff]
          %v511 = vld [vmem:[#allocation12 + $0x8] sm:$0xff]
          %v512 = vld [vmem:[#allocation12 + $0x10] sm:$0xff]
          %v513 = vld [vmem:[#allocation12 + $0x18] sm:$0xff]
          %v514 = vld [vmem:[#allocation12 + $0x20] sm:$0xff]
          %v515 = vld [vmem:[#allocation12 + $0x28] sm:$0xff]
          %v516 = vld [vmem:[#allocation12 + $0x30] sm:$0xff]
          %v517 = vld [vmem:[#allocation12 + $0x38] sm:$0xff]
          %v518 = vld [vmem:[#allocation12 + $0x40] sm:$0xff]
          %v519 = vld [vmem:[#allocation12 + $0x48] sm:$0xff]
          %v520 = vld [vmem:[#allocation12 + $0x50] sm:$0xff]
          %v521 = vld [vmem:[#allocation12 + $0x58] sm:$0xff]
          %v522 = vld [vmem:[#allocation12 + $0x60] sm:$0xff]
          %v523 = vld [vmem:[#allocation12 + $0x68] sm:$0xff]
          %v524 = vld [vmem:[#allocation12 + $0x70] sm:$0xff]
          %v525 = vld [vmem:[#allocation12 + $0x78] sm:$0xff]
          %v526 = vld [vmem:[%s4] sm:$0x1]
          %v528 = vperm.slane %v526, 0
          %530 = vmatpush.msra.mxu0 %v525
          %531 = vmatpush.msra.mxu0 %v524
          %532 = vmatpush.msra.mxu0 %v523
          %533 = vmatpush.msra.mxu0 %v522
          %534 = vmatpush.msra.mxu0 %v521
          %535 = vmatpush.msra.mxu0 %v520
          %536 = vmatpush.msra.mxu0 %v519
          %537 = vmatpush.msra.mxu0 %v518
          %538 = vmatpush.msra.mxu0 %v517
          %539 = vmatpush.msra.mxu0 %v516
          %540 = vmatpush.msra.mxu0 %v515
          %541 = vmatpush.msra.mxu0 %v514
          %542 = vmatpush.msra.mxu0 %v513
          %543 = vmatpush.msra.mxu0 %v512
          %544 = vmatpush.msra.mxu0 %v511
          %545 = vmatpush.msra.mxu0 %v510
          %546 = vmatmul.f32.gmra.mxu0 %v509
          %v547 = vpop.f32.mrf.mxu0
          %v548 = vadd.f32 %v528, %v547
          %549 = vdwg.mxu0
          %v550 = vmul.f32 %v548, 0.17677669
          %551 = vst [vmem:[#allocation2] sm:$0xff] %v550
          %vm552 = vcmask 7168
          %553 = vst.msk [vmem:[#allocation3] sm:$0xff] %vm552, -1e+30
          %554 = vst.msk [vmem:[#allocation4] sm:$0xff] %vm552, 0.0
          %555 = vst [vmem:[#allocation5] sm:$0xff] 0.0
        $region84: #{tpu_custom_call.1} parent=55 // pred_fallthru
          _
        %v556 = vld [vmem:[%s434] sm:$0xff]
        %v557 = vld [vmem:[#allocation14] sm:$0xff]
        %v558 = vld [vmem:[#allocation14 + $0x8] sm:$0xff]
        %v559 = vld [vmem:[#allocation14 + $0x10] sm:$0xff]
        %v560 = vld [vmem:[#allocation14 + $0x18] sm:$0xff]
        %v561 = vld [vmem:[#allocation14 + $0x20] sm:$0xff]
        %v562 = vld [vmem:[#allocation14 + $0x28] sm:$0xff]
        %v563 = vld [vmem:[#allocation14 + $0x30] sm:$0xff]
        %v564 = vld [vmem:[#allocation14 + $0x38] sm:$0xff]
        %v565 = vld [vmem:[#allocation14 + $0x40] sm:$0xff]
        %v566 = vld [vmem:[#allocation14 + $0x48] sm:$0xff]
        %v567 = vld [vmem:[#allocation14 + $0x50] sm:$0xff]
        %v568 = vld [vmem:[#allocation14 + $0x58] sm:$0xff]
        %v569 = vld [vmem:[#allocation14 + $0x60] sm:$0xff]
        %v570 = vld [vmem:[#allocation14 + $0x68] sm:$0xff]
        %v571 = vld [vmem:[#allocation14 + $0x70] sm:$0xff]
        %v572 = vld [vmem:[#allocation14 + $0x78] sm:$0xff]
        %v573 = vld [vmem:[%s6] sm:$0x1]
        %v575 = vperm.slane %v573, 0
        %577 = vmatpush.msra.mxu0 %v572
        %578 = vmatpush.msra.mxu0 %v571
        %579 = vmatpush.msra.mxu0 %v570
        %580 = vmatpush.msra.mxu0 %v569
        %581 = vmatpush.msra.mxu0 %v568
        %582 = vmatpush.msra.mxu0 %v567
        %583 = vmatpush.msra.mxu0 %v566
        %584 = vmatpush.msra.mxu0 %v565
        %585 = vmatpush.msra.mxu0 %v564
        %586 = vmatpush.msra.mxu0 %v563
        %587 = vmatpush.msra.mxu0 %v562
        %588 = vmatpush.msra.mxu0 %v561
        %589 = vmatpush.msra.mxu0 %v560
        %590 = vmatpush.msra.mxu0 %v559
        %591 = vmatpush.msra.mxu0 %v558
        %592 = vmatpush.msra.mxu0 %v557
        %593 = vmatmul.f32.gmra.mxu0 %v556
        %v594 = vpop.f32.mrf.mxu0
        %v595 = vadd.f32 %v575, %v594
        %596 = vdwg.mxu0
        %v597 = vld [vmem:[%s444] sm:$0xff]
        %v598 = vld [vmem:[#allocation15] sm:$0xff]
        %v599 = vld [vmem:[#allocation15 + $0x8] sm:$0xff]
        %v600 = vld [vmem:[#allocation15 + $0x10] sm:$0xff]
        %v601 = vld [vmem:[#allocation15 + $0x18] sm:$0xff]
        %v602 = vld [vmem:[#allocation15 + $0x20] sm:$0xff]
        %v603 = vld [vmem:[#allocation15 + $0x28] sm:$0xff]
        %v604 = vld [vmem:[#allocation15 + $0x30] sm:$0xff]
        %v605 = vld [vmem:[#allocation15 + $0x38] sm:$0xff]
        %v606 = vld [vmem:[#allocation15 + $0x40] sm:$0xff]
        %v607 = vld [vmem:[#allocation15 + $0x48] sm:$0xff]
        %v608 = vld [vmem:[#allocation15 + $0x50] sm:$0xff]
        %v609 = vld [vmem:[#allocation15 + $0x58] sm:$0xff]
        %v610 = vld [vmem:[#allocation15 + $0x60] sm:$0xff]
        %v611 = vld [vmem:[#allocation15 + $0x68] sm:$0xff]
        %v612 = vld [vmem:[#allocation15 + $0x70] sm:$0xff]
        %v613 = vld [vmem:[#allocation15 + $0x78] sm:$0xff]
        %v614 = vld [vmem:[%s8] sm:$0x1]
        %v616 = vperm.slane %v614, 0
        %618 = vmatpush.msra.mxu0 %v613
        %619 = vmatpush.msra.mxu0 %v612
        %620 = vmatpush.msra.mxu0 %v611
        %621 = vmatpush.msra.mxu0 %v610
        %622 = vmatpush.msra.mxu0 %v609
        %623 = vmatpush.msra.mxu0 %v608
        %624 = vmatpush.msra.mxu0 %v607
        %625 = vmatpush.msra.mxu0 %v606
        %626 = vmatpush.msra.mxu0 %v605
        %627 = vmatpush.msra.mxu0 %v604
        %628 = vmatpush.msra.mxu0 %v603
        %629 = vmatpush.msra.mxu0 %v602
        %630 = vmatpush.msra.mxu0 %v601
        %631 = vmatpush.msra.mxu0 %v600
        %632 = vmatpush.msra.mxu0 %v599
        %633 = vmatpush.msra.mxu0 %v598
        %634 = vmatmul.f32.gmra.mxu0 %v597
        %v635 = vpop.f32.mrf.mxu0
        %v636 = vadd.f32 %v616, %v635
        %637 = vdwg.mxu0
        %v638 = vld [vmem:[#allocation2] sm:$0xff]
        %639 = vmatpush.xpose.msra.mxu0 0.0
        %640 = vmatpush.xpose.msra.mxu0 0.0
        %641 = vmatpush.xpose.msra.mxu0 0.0
        %642 = vmatpush.xpose.msra.mxu0 0.0
        %643 = vmatpush.xpose.msra.mxu0 0.0
        %644 = vmatpush.xpose.msra.mxu0 0.0
        %645 = vmatpush.xpose.msra.mxu0 0.0
        %646 = vmatpush.xpose.msra.mxu0 0.0
        %647 = vmatpush.xpose.msra.mxu0 0.0
        %648 = vmatpush.xpose.msra.mxu0 0.0
        %649 = vmatpush.xpose.msra.mxu0 0.0
        %650 = vmatpush.xpose.msra.mxu0 0.0
        %651 = vmatpush.xpose.msra.mxu0 0.0
        %652 = vmatpush.xpose.msra.mxu0 0.0
        %653 = vmatpush.xpose.msra.mxu0 0.0
        %654 = vmatpush.xpose.msra.mxu0 %v595
        %655 = vmatmul.f32.gmra.mxu0 %v638
        %v656 = vpop.f32.mrf.mxu0
        %v657 = vadd.f32 0.0, %v656
        %658 = vdwg.mxu0
        %v659 = vld [vmem:[#allocation3] sm:$0xff]
        %vm660 = vcmask 64512
        %v661 = vsel %vm660, %v657, -inf
        %662 = vmax.xlane.f32.xlu0 %v661
        %v663 = vpop.xlane.xlu0 %662
        %v664 = vmax.f32 %v659, %v663
        %v665 = vsub.f32 %v659, %v664
        %v666 = vmul.f32 %v665, 1.442695
        %v667 = vpow.pop %v666
        %669 = vset.pattern.permute.xlu0 0
        %670 = vperm.xlu0 %669, %v664
        %v671 = vpop.permute.xlu0 %670
        %v673 = vsub.f32 %v657, %v671
        %v674 = vmul.f32 %v673, 1.442695
        %v675 = vpow.pop %v674
        %v676 = vld [vmem:[#allocation4] sm:$0xff]
        %v677 = vmul.f32 %v667, %v676
        %v678 = vsel %vm660, %v675, 0.0
        %679 = vadd.xlane.f32.xlu0 %v678
        %v680 = vpop.xlane.xlu0 %679
        %v681 = vadd.f32 %v677, %v680
        %vm682 = vcmask 7168
        %683 = vst.msk [vmem:[#allocation4] sm:$0xff] %vm682, %v681
        %v684 = vld [vmem:[#allocation5] sm:$0xff]
        %686 = vset.pattern.permute.xlu0 0
        %687 = vperm.xlu0 %686, %v667
        %v688 = vpop.permute.xlu0 %687
        %v690 = vmul.f32 %v688, %v684
        %v692 = vsel %vm660, %v675, 0
        %694 = vmatpush.msra.mxu0 0.0
        %695 = vmatpush.msra.mxu0 0.0
        %696 = vmatpush.msra.mxu0 0.0
        %697 = vmatpush.msra.mxu0 0.0
        %698 = vmatpush.msra.mxu0 0.0
        %699 = vmatpush.msra.mxu0 0.0
        %700 = vmatpush.msra.mxu0 0.0
        %701 = vmatpush.msra.mxu0 0.0
        %702 = vmatpush.msra.mxu0 0.0
        %703 = vmatpush.msra.mxu0 0.0
        %704 = vmatpush.msra.mxu0 0.0
        %705 = vmatpush.msra.mxu0 0.0
        %706 = vmatpush.msra.mxu0 0.0
        %707 = vmatpush.msra.mxu0 0.0
        %708 = vmatpush.msra.mxu0 0.0
        %709 = vmatpush.msra.mxu0 %v636
        %710 = vmatmul.f32.gmra.mxu0 %v692
        %v711 = vpop.f32.mrf.mxu0
        %v712 = vadd.f32 0.0, %v711
        %713 = vdwg.mxu0
        %v714 = vadd.f32 %v690, %v712
        %715 = vst [vmem:[#allocation5] sm:$0xff] %v714
        %716 = vst.msk [vmem:[#allocation3] sm:$0xff] %vm682, %v664
        // Predicated region
        $region85: #{tpu_custom_call.1} parent=55 // pred_check
          %p717 = pneg %p505
        $region86: #{tpu_custom_call.1} parent=55 // pred_check_branch
          %719 = sbr.rel (%p717) target = $region88
        $region87: #{tpu_custom_call.1} parent=55 // pred_region
          %v720 = vld [vmem:[#allocation4] sm:$0xff]
          %v721 = vrcp.pop %v720
          %v722 = vmul.f32 %v720, %v721
          %v723 = vsub.f32 2.0, %v722
          %v724 = vmul.f32 %v721, %v723
          %v725 = vld [vmem:[#allocation5] sm:$0xff]
          %727 = vset.pattern.permute.xlu0 0
          %728 = vperm.xlu0 %727, %v724
          %v729 = vpop.permute.xlu0 %728
          %v731 = vmul.f32 %v725, %v729
          %732 = vst [vmem:[%s504] sm:$0xff] %v731
        $region88: #{tpu_custom_call.1} parent=55 // pred_fallthru
          _
        %s733 = sand.u32 %s270, 1
        %s734 = scalar_lea.sflag [#allocation8], %s733
        %s735 = sand.u32 %s270, 1
        %s736 = smul.addr %s735, 8
        %s737 = scalar_lea.vmem [#allocation17], %s736
        // Predicated region
        $region89: #{tpu_custom_call.1} parent=55 // pred_check
          %p738 = pneg %p280
        $region90: #{tpu_custom_call.1} parent=55 // pred_check_branch
          %740 = sbr.rel (%p738) target = $region92
        $region91: #{tpu_custom_call.1} parent=55 // pred_region
          %742 = vsyncadd %s734, 0
          %s743 = sadd.s32 %s37, %s36
          %s744 = smul.addr %s743, 8
          %s745 = scalar_lea.hbm %s9, %s744
          %s747 = sshll.u32 %s737, 4
          %s748 = int_to_ptr.vmem [resolvable:$true] %s747
          %s749 = sshll.u32 %s745, 4
          %s750 = int_to_ptr.hbm [resolvable:$true] %s749
          %752 = dma.vmem_to_hbm [thread:$0]  %s748, 128, %s750, %s734
        $region92: #{tpu_custom_call.1} parent=55 // pred_fallthru
          _
      $region56: #{tpu_custom_call.1} parent=5 // pred_fallthru
        _
      %p753 = scmp.le.s32.totalorder 2, %s26
      // Predicated region
      $region93: #{tpu_custom_call.1} parent=5 // pred_check
        %p754 = pneg %p753
      $region94: #{tpu_custom_call.1} parent=5 // pred_check_branch
        %756 = sbr.rel (%p754) target = $region96
      $region95: #{tpu_custom_call.1} parent=5 // pred_region
        %s757 = ssub.s32 %s26, 2
        // Predicated region
        $region97: #{tpu_custom_call.1} parent=95 // pred_check
          %p758 = pneg %p286
        $region98: #{tpu_custom_call.1} parent=95 // pred_check_branch
          %760 = sbr.rel (%p758) target = $region100
        $region99: #{tpu_custom_call.1} parent=95 // pred_region
          %s761 = sand.u32 %s271, 1
          %s762 = scalar_lea.sflag [#allocation8], %s761
          %s763 = sand.u32 %s271, 1
          %s764 = smul.addr %s763, 8
          %s765 = scalar_lea.vmem [#allocation17], %s764
          %767 = dma.done %s762, 128
        $region100: #{tpu_custom_call.1} parent=95 // pred_fallthru
          _
      $region96: #{tpu_custom_call.1} parent=5 // pred_fallthru
        _
    $region6: #{tpu_custom_call.1} parent=1 // loop_footer
      %s30 = sadd.s32 1, %s26
    $region7: #{tpu_custom_call.1} parent=1 // loop_footer_branch
      %25 = sbr.rel target = $region3
    $region8: #{tpu_custom_call.1} parent=1 // loop_exit
      _
    %768 = vsyncpa [#allocation7], 1
    %s769 = scalar_lea.sflag [#allocation7], 1
    %770 = vsyncpa %s769, 1
    %771 = vsyncpa [#allocation10], 1
    %s772 = scalar_lea.sflag [#allocation10], 1
    %773 = vsyncpa %s772, 1
    %774 = vsyncpa [#allocation13], 1
    %775 = vsyncpa [#allocation16], 1
    %776 = vsyncpa [#allocation8], 1
    %s777 = scalar_lea.sflag [#allocation8], 1
    %778 = vsyncpa %s777, 1

</llo_original>
